<compile_context>
chip_gen: v7x
topology: tpu7x:2x2x1
jax: 0.10.0
libtpu: 0.0.40
codegen_flags: <defaults>
</compile_context>

<pallas_src>
import numpy as np
import jax
import jax.numpy as jnp
from jax import lax
from jax.experimental import pallas as pl
from jax.experimental.pallas import tpu as pltpu


# ----------------------------------------------------------------------------
# Deterministic parameter init (mirrors _init_layer: orthogonal(gain=sqrt(2)),
# bias = 0).  Weights are kept in torch layout (out, in): that is exactly the
# orientation the batch-on-lanes kernel wants (h = W @ x^T).
# ----------------------------------------------------------------------------
def orthogonal_init(key, out_dim, in_dim, gain):
    rows, cols = out_dim, in_dim
    flat = jax.random.normal(key, (rows, cols), dtype=jnp.float32)
    if rows < cols:
        flat = flat.T
    q, r = jnp.linalg.qr(flat)
    d = jnp.sign(jnp.diag(r))
    d = jnp.where(d == 0, 1.0, d)  # guard against zero diagonal entries
    q = q * d[None, :]
    if rows < cols:
        q = q.T
    return gain * q  # (out_dim, in_dim)


def make_critic_params(key, critic_input_dim, task_emb_dim, critic_hiddens):
    input_dim = critic_input_dim + (task_emb_dim if task_emb_dim else 0)
    dims = [input_dim] + list(critic_hiddens) + [1]
    gain = float(np.sqrt(2.0))
    params = []
    for i in range(len(dims) - 1):
        key, sub = jax.random.split(key)
        w = orthogonal_init(sub, dims[i + 1], dims[i], gain)  # (out, in)
        b = jnp.zeros((dims[i + 1],), dtype=jnp.float32)
        params.append((w, b))
    return params


# ----------------------------------------------------------------------------
# Kernel factory: fused-concat MLP, batch on the lane axis.
#
# Ref order: xs[0..n_inputs)            (TILE_B, D_i) activation tiles
#            w1s[0..n_inputs)           (H1, D_i)     layer-1 weight slabs
#            b1                         (H1, 1)
#            (w_i (H_out,H_in), b_i (H_out,1)) for each middle layer
#            w_out (1, H_last), b_out (1, 1)
#            out_ref                    (1, TILE_B)   lane-dense output tile
# ----------------------------------------------------------------------------
def _make_critic_kernel(n_inputs, n_mid):
    def kernel(*refs):
        idx = 0
        xs = refs[idx:idx + n_inputs]; idx += n_inputs
        w1s = refs[idx:idx + n_inputs]; idx += n_inputs
        b1 = refs[idx]; idx += 1
        mids = []
        for _ in range(n_mid):
            mids.append((refs[idx], refs[idx + 1]))
            idx += 2
        w_out = refs[idx]
        b_out = refs[idx + 1]
        out_ref = refs[idx + 2]

        # Layer 1 (fused concat), batch on lanes:
        #   h = sum_s W_s(H, D_s) . x_s(TILE_B, D_s)^T  ->  (H, TILE_B)
        # Contracting the minor dim of x costs one small transpose of the
        # input tile per step (XLU, hidden under the input DMA) and keeps all
        # downstream activations lane-dense.
        def slab(w_ref, x_ref):
            return lax.dot_general(
                w_ref[...], x_ref[...].astype(jnp.float32),
                dimension_numbers=(((1,), (1,)), ((), ())),
                preferred_element_type=jnp.float32)

        h = slab(w1s[0], xs[0])
        for w_ref, x_ref in zip(w1s[1:], xs[1:]):
            h = h + slab(w_ref, x_ref)
        h = jnp.maximum(h + b1[...], 0.0)

        # Middle Linear + ReLU layers: (H_out, H_in) @ (H_in, TILE_B).
        for w_ref, b_ref in mids:
            h = jnp.dot(w_ref[...], h, preferred_element_type=jnp.float32)
            h = jnp.maximum(h + b_ref[...], 0.0)

        # Final Linear(H_last, 1): (1, H) @ (H, TILE_B) -> (1, TILE_B),
        # already lane-dense, no transpose needed.
        out = jnp.dot(w_out[...], h, preferred_element_type=jnp.float32)
        out_ref[...] = (out + b_out[...]).astype(out_ref.dtype)

    return kernel


# ----------------------------------------------------------------------------
# Tile / VMEM-limit selection.
# ----------------------------------------------------------------------------
def _pick_tile_b(batch, tile_b):
    """Batch tile: big enough to amortize the ~0.35us/step grid overhead, but
    chosen so mid-sized batches still yield >= 2 (target 4) grid steps so the
    "parallel" axis can use both TensorCores on v7x."""
    if batch <= 256:
        return batch                       # single block == full array dims
    target = -(-batch // 4)                # ceil(batch / 4): aim for >=4 steps
    target = ((target + 127) // 128) * 128
    return max(128, min(tile_b, target))


def _default_vmem_limit():
    # v5e/v6e have 128 MiB physical VMEM per core -> allow 64 MiB; v7x has
    # 64 MiB per TensorCore -> stay well under with 40 MiB.
    try:
        phys = pltpu.get_tpu_info().vmem_capacity_bytes
        if phys is None:
            return 32 << 20
        return (64 << 20) if phys >= (100 << 20) else (40 << 20)
    except Exception:
        return 32 << 20


def _as_float(x):
    x = jnp.asarray(x)
    if not jnp.issubdtype(x.dtype, jnp.floating):
        x = x.astype(jnp.float32)
    return x  # bf16 inputs are kept as bf16 (streamed, upcast in-kernel)


# ----------------------------------------------------------------------------
# Wrapper: batch-tiled pallas_call with VMEM-resident weights.
# ----------------------------------------------------------------------------
def critic_forward(inputs, task_emb, params, *, tile_b=4096,
                   vmem_limit_bytes=None):
    """Pallas-backed Critic.forward.

    inputs:   (B, critic_input_dim) float (f32 or bf16)
    task_emb: (B, task_emb_dim) float or None
    params:   list of (W[out,in], b[out]) per Linear layer (torch layout).
    Returns (B, 1) f32.
    """
    assert tile_b % 128 == 0, "tile_b must be a multiple of 128"
    assert len(params) >= 2, "need at least one hidden layer"  # TODO(synk): critic_hiddens == [] path
    inputs = _as_float(inputs)

    first_w, first_b = params[0]          # (H1, D_total), (H1,)
    mids = params[1:-1]
    w_out, b_out = params[-1]             # (1, H_last), (1,)
    assert w_out.shape[0] == 1

    # Fused concatenation: split W1 into one slab per input stream.
    if task_emb is not None:
        task_emb = _as_float(task_emb)
        d_in = inputs.shape[1]
        xs = [inputs, task_emb]
        w1s = [first_w[:, :d_in], first_w[:, d_in:]]
    else:
        xs = [inputs]
        w1s = [first_w]

    B = inputs.shape[0]
    TILE_B = _pick_tile_b(B, tile_b)
    grid = (pl.cdiv(B, TILE_B),)           # no jnp.pad: tail tile over-reads,
                                           # OOB output lanes are dropped.
    n_inputs = len(xs)
    n_mid = len(mids)

    # Flat parameter operand list (order must match the kernel).
    param_args = [jnp.asarray(w, jnp.float32) for w in w1s]
    param_args.append(jnp.asarray(first_b, jnp.float32).reshape(-1, 1))
    for (w, b) in mids:
        param_args.append(jnp.asarray(w, jnp.float32))
        param_args.append(jnp.asarray(b, jnp.float32).reshape(-1, 1))
    param_args.append(jnp.asarray(w_out, jnp.float32))           # (1, H_last)
    param_args.append(jnp.asarray(b_out, jnp.float32).reshape(1, 1))

    in_specs = []
    for x in xs:
        in_specs.append(pl.BlockSpec((TILE_B, x.shape[1]), lambda i: (i, 0)))
    for p in param_args:
        in_specs.append(pl.BlockSpec(p.shape, lambda i: (0, 0)))  # VMEM-resident

    out_spec = pl.BlockSpec((1, TILE_B), lambda i: (0, i))         # lane-dense

    # Advisory cost estimate for XLA's scheduler.
    layer_dims = [(first_w.shape[1], first_w.shape[0])]
    layer_dims += [(w.shape[1], w.shape[0]) for (w, _) in mids]
    layer_dims += [(w_out.shape[1], w_out.shape[0])]
    flops = int(2 * B * sum(i * o for i, o in layer_dims))
    bytes_accessed = int(sum(x.size * x.dtype.itemsize for x in xs)
                         + sum(p.size * 4 for p in param_args) + B * 4)
    cost = pl.CostEstimate(flops=flops, transcendentals=0,
                           bytes_accessed=bytes_accessed)

    if vmem_limit_bytes is None:
        vmem_limit_bytes = _default_vmem_limit()

    kernel = _make_critic_kernel(n_inputs, n_mid)

    out = pl.pallas_call(
        kernel,
        out_shape=jax.ShapeDtypeStruct((1, B), jnp.float32),
        grid_spec=pltpu.PrefetchScalarGridSpec(
            num_scalar_prefetch=0,
            grid=grid,
            in_specs=in_specs,
            out_specs=out_spec),
        compiler_params=pltpu.CompilerParams(
            dimension_semantics=("parallel",),   # batch tiles across TCs (v7x)
            vmem_limit_bytes=vmem_limit_bytes),
        cost_estimate=cost,
    )(*xs, *param_args)

    return out.reshape(B, 1)   # (1, B) -> (B, 1): contiguous reshape, free


# ----------------------------------------------------------------------------
# Pure-JAX reference for a correctness check (torch-layout weights).
# ----------------------------------------------------------------------------
def critic_forward_ref(inputs, task_emb, params):
    inputs = jnp.asarray(inputs, jnp.float32)
    if task_emb is not None:
        x = jnp.concatenate([inputs, jnp.asarray(task_emb, jnp.float32)], axis=-1)
    else:
        x = inputs
    h = x
    for (w, b) in params[:-1]:
        h = jnp.maximum(h @ w.T + b, 0.0)
    w, b = params[-1]
    return h @ w.T + b


if __name__ == "__main__":
    # Small shapes consistent with the module.
    batch = 8
    critic_input_dim = 24
    task_emb_dim = 8
    critic_hiddens = [32, 32]  # critic = build_sequential(dim, [32, 32, 1], 'relu')

    key = jax.random.PRNGKey(0)
    k_params, k_in, k_emb = jax.random.split(key, 3)

    params = make_critic_params(k_params, critic_input_dim, task_emb_dim,
                                critic_hiddens)

    inputs = jax.random.normal(k_in, (batch, critic_input_dim), dtype=jnp.float32)
    task_emb = jax.random.normal(k_emb, (batch, task_emb_dim), dtype=jnp.float32)

    out = jax.block_until_ready(critic_forward(inputs, task_emb, params))
    ref = critic_forward_ref(inputs, task_emb, params)
    np.testing.assert_allclose(np.asarray(out), np.asarray(ref),
                               rtol=1e-5, atol=1e-5)
    assert out.shape == (batch, 1)

    # Multi-tile path: grid > 1 with a non-divisible tail tile (no jnp.pad).
    big_b = 300
    k_in2, k_emb2 = jax.random.split(jax.random.PRNGKey(1))
    inputs2 = jax.random.normal(k_in2, (big_b, critic_input_dim), dtype=jnp.float32)
    task_emb2 = jax.random.normal(k_emb2, (big_b, task_emb_dim), dtype=jnp.float32)
    out2 = jax.block_until_ready(critic_forward(inputs2, task_emb2, params))
    ref2 = critic_forward_ref(inputs2, task_emb2, params)
    np.testing.assert_allclose(np.asarray(out2), np.asarray(ref2),
                               rtol=1e-5, atol=1e-5)
    assert out2.shape == (big_b, 1)

    # No-task-emb path (task_emb=None).
    params_nt = make_critic_params(k_params, critic_input_dim, 0, critic_hiddens)
    out3 = jax.block_until_ready(critic_forward(inputs, None, params_nt))
    ref3 = critic_forward_ref(inputs, None, params_nt)
    np.testing.assert_allclose(np.asarray(out3), np.asarray(ref3),
                               rtol=1e-5, atol=1e-5)
    assert out3.shape == (batch, 1)

    # bf16 input streaming path (caller already holds bf16 activations):
    # kernel upcasts in VMEM; compare against f32 ref fed the rounded inputs.
    in_bf = inputs.astype(jnp.bfloat16)
    te_bf = task_emb.astype(jnp.bfloat16)
    out4 = jax.block_until_ready(critic_forward(in_bf, te_bf, params))
    ref4 = critic_forward_ref(in_bf.astype(jnp.float32),
                              te_bf.astype(jnp.float32), params)
    np.testing.assert_allclose(np.asarray(out4), np.asarray(ref4),
                               rtol=1e-4, atol=1e-4)
    assert out4.shape == (batch, 1)

    print("KERNEL_OK")
</pallas_src>

<mosaic_0001>
module attributes {stable_mosaic.version = 11 : i64} {
  func.func @kernel(%arg0: i32, %arg1: memref<8x24xf32, #tpu.memory_space<vmem>>, %arg2: memref<8x8xf32, #tpu.memory_space<vmem>>, %arg3: memref<32x24xf32, #tpu.memory_space<vmem>>, %arg4: memref<32x8xf32, #tpu.memory_space<vmem>>, %arg5: memref<32x1xf32, #tpu.memory_space<vmem>>, %arg6: memref<32x32xf32, #tpu.memory_space<vmem>>, %arg7: memref<32x1xf32, #tpu.memory_space<vmem>>, %arg8: memref<1x32xf32, #tpu.memory_space<vmem>>, %arg9: memref<1x1xf32, #tpu.memory_space<vmem>>, %arg10: memref<1x8xf32, #tpu.memory_space<vmem>>) attributes {dimension_semantics = [#tpu.dimension_semantics<parallel>], iteration_bounds = array<i64: 1>, scalar_prefetch = 0 : i64, scratch_operands = 0 : i64, tpu.core_type = #tpu.core_type<tc>, window_params = [{transform_indices = @transform_0, window_bounds = array<i64: 8, 24>}, {transform_indices = @transform_1, window_bounds = array<i64: 8, 8>}, {pipeline_mode = #tpu.pipeline_mode<synchronous>, transform_indices = @transform_2, window_bounds = array<i64: 32, 24>}, {pipeline_mode = #tpu.pipeline_mode<synchronous>, transform_indices = @transform_3, window_bounds = array<i64: 32, 8>}, {pipeline_mode = #tpu.pipeline_mode<synchronous>, transform_indices = @transform_4, window_bounds = array<i64: 32, 1>}, {pipeline_mode = #tpu.pipeline_mode<synchronous>, transform_indices = @transform_5, window_bounds = array<i64: 32, 32>}, {pipeline_mode = #tpu.pipeline_mode<synchronous>, transform_indices = @transform_6, window_bounds = array<i64: 32, 1>}, {pipeline_mode = #tpu.pipeline_mode<synchronous>, transform_indices = @transform_7, window_bounds = array<i64: 1, 32>}, {pipeline_mode = #tpu.pipeline_mode<synchronous>, transform_indices = @transform_8, window_bounds = array<i64: 1, 1>}, {transform_indices = @transform_9, window_bounds = array<i64: 1, 8>}]} {
    %c0 = arith.constant 0 : index
    %c0_0 = arith.constant 0 : index
    %0 = vector.load %arg3[%c0, %c0_0] : memref<32x24xf32, #tpu.memory_space<vmem>>, vector<32x24xf32>
    %c0_1 = arith.constant 0 : index
    %c0_2 = arith.constant 0 : index
    %1 = vector.load %arg1[%c0_1, %c0_2] : memref<8x24xf32, #tpu.memory_space<vmem>>, vector<8x24xf32>
    %cst = arith.constant dense<0.000000e+00> : vector<32x8xf32>
    %2 = tpu.matmul %0, %1, %cst {dimension_numbers = #tpu.dot_dimension_numbers<[1], [1], [0], [0], [0, 0, 1, 0], [], []>} : vector<32x24xf32>, vector<8x24xf32>, vector<32x8xf32> -> vector<32x8xf32>
    %c0_3 = arith.constant 0 : index
    %c0_4 = arith.constant 0 : index
    %3 = vector.load %arg4[%c0_3, %c0_4] : memref<32x8xf32, #tpu.memory_space<vmem>>, vector<32x8xf32>
    %c0_5 = arith.constant 0 : index
    %c0_6 = arith.constant 0 : index
    %4 = vector.load %arg2[%c0_5, %c0_6] : memref<8x8xf32, #tpu.memory_space<vmem>>, vector<8x8xf32>
    %cst_7 = arith.constant dense<0.000000e+00> : vector<32x8xf32>
    %5 = tpu.matmul %3, %4, %cst_7 {dimension_numbers = #tpu.dot_dimension_numbers<[1], [1], [0], [0], [0, 0, 1, 0], [], []>} : vector<32x8xf32>, vector<8x8xf32>, vector<32x8xf32> -> vector<32x8xf32>
    %6 = arith.addf %2, %5 : vector<32x8xf32>
    %c0_8 = arith.constant 0 : index
    %c0_9 = arith.constant 0 : index
    %7 = vector.load %arg5[%c0_8, %c0_9] : memref<32x1xf32, #tpu.memory_space<vmem>>, vector<32x1xf32>
    %8 = vector.broadcast %7 : vector<32x1xf32> to vector<32x8xf32>
    %9 = arith.addf %6, %8 : vector<32x8xf32>
    %cst_10 = arith.constant 0.000000e+00 : f32
    %10 = vector.broadcast %cst_10 : f32 to vector<32x8xf32>
    %11 = arith.maximumf %9, %10 : vector<32x8xf32>
    %c0_11 = arith.constant 0 : index
    %c0_12 = arith.constant 0 : index
    %12 = vector.load %arg6[%c0_11, %c0_12] : memref<32x32xf32, #tpu.memory_space<vmem>>, vector<32x32xf32>
    %cst_13 = arith.constant dense<0.000000e+00> : vector<32x8xf32>
    %13 = tpu.matmul %12, %11, %cst_13 {dimension_numbers = #tpu.dot_dimension_numbers<[1], [0], [0], [1], [0, 0, 1, 1], [], []>} : vector<32x32xf32>, vector<32x8xf32>, vector<32x8xf32> -> vector<32x8xf32>
    %c0_14 = arith.constant 0 : index
    %c0_15 = arith.constant 0 : index
    %14 = vector.load %arg7[%c0_14, %c0_15] : memref<32x1xf32, #tpu.memory_space<vmem>>, vector<32x1xf32>
    %15 = vector.broadcast %14 : vector<32x1xf32> to vector<32x8xf32>
    %16 = arith.addf %13, %15 : vector<32x8xf32>
    %cst_16 = arith.constant 0.000000e+00 : f32
    %17 = vector.broadcast %cst_16 : f32 to vector<32x8xf32>
    %18 = arith.maximumf %16, %17 : vector<32x8xf32>
    %c0_17 = arith.constant 0 : index
    %c0_18 = arith.constant 0 : index
    %19 = vector.load %arg8[%c0_17, %c0_18] : memref<1x32xf32, #tpu.memory_space<vmem>>, vector<1x32xf32>
    %cst_19 = arith.constant dense<0.000000e+00> : vector<1x8xf32>
    %20 = tpu.matmul %19, %18, %cst_19 {dimension_numbers = #tpu.dot_dimension_numbers<[1], [0], [0], [1], [0, 0, 1, 1], [], []>} : vector<1x32xf32>, vector<32x8xf32>, vector<1x8xf32> -> vector<1x8xf32>
    %c0_20 = arith.constant 0 : index
    %c0_21 = arith.constant 0 : index
    %21 = vector.load %arg9[%c0_20, %c0_21] : memref<1x1xf32, #tpu.memory_space<vmem>>, vector<1x1xf32>
    %22 = vector.broadcast %21 : vector<1x1xf32> to vector<1x8xf32>
    %23 = arith.addf %20, %22 : vector<1x8xf32>
    %c0_22 = arith.constant 0 : index
    %c0_23 = arith.constant 0 : index
    %24 = vector.load %arg10[%c0_22, %c0_23] : memref<1x8xf32, #tpu.memory_space<vmem>>, vector<1x8xf32>
    tpu.vector_store %arg10[%c0_22, %c0_23], %23 {strides = array<i32>} : memref<1x8xf32, #tpu.memory_space<vmem>>, vector<1x8xf32>,
    return
  }
  func.func @transform_0(%arg0: i32) -> (i32, i32) {
    %c0_i32 = arith.constant 0 : i32
    %c0_i32_0 = arith.constant 0 : i32
    return %arg0, %c0_i32 : i32, i32
  }
  func.func @transform_1(%arg0: i32) -> (i32, i32) {
    %c0_i32 = arith.constant 0 : i32
    %c0_i32_0 = arith.constant 0 : i32
    return %arg0, %c0_i32 : i32, i32
  }
  func.func @transform_2(%arg0: i32) -> (i32, i32) {
    %c0_i32 = arith.constant 0 : i32
    %c0_i32_0 = arith.constant 0 : i32
    %c0_i32_1 = arith.constant 0 : i32
    return %c0_i32, %c0_i32_0 : i32, i32
  }
  func.func @transform_3(%arg0: i32) -> (i32, i32) {
    %c0_i32 = arith.constant 0 : i32
    %c0_i32_0 = arith.constant 0 : i32
    %c0_i32_1 = arith.constant 0 : i32
    return %c0_i32, %c0_i32_0 : i32, i32
  }
  func.func @transform_4(%arg0: i32) -> (i32, i32) {
    %c0_i32 = arith.constant 0 : i32
    %c0_i32_0 = arith.constant 0 : i32
    %c0_i32_1 = arith.constant 0 : i32
    return %c0_i32, %c0_i32_0 : i32, i32
  }
  func.func @transform_5(%arg0: i32) -> (i32, i32) {
    %c0_i32 = arith.constant 0 : i32
    %c0_i32_0 = arith.constant 0 : i32
    %c0_i32_1 = arith.constant 0 : i32
    return %c0_i32, %c0_i32_0 : i32, i32
  }
  func.func @transform_6(%arg0: i32) -> (i32, i32) {
    %c0_i32 = arith.constant 0 : i32
    %c0_i32_0 = arith.constant 0 : i32
    %c0_i32_1 = arith.constant 0 : i32
    return %c0_i32, %c0_i32_0 : i32, i32
  }
  func.func @transform_7(%arg0: i32) -> (i32, i32) {
    %c0_i32 = arith.constant 0 : i32
    %c0_i32_0 = arith.constant 0 : i32
    %c0_i32_1 = arith.constant 0 : i32
    return %c0_i32, %c0_i32_0 : i32, i32
  }
  func.func @transform_8(%arg0: i32) -> (i32, i32) {
    %c0_i32 = arith.constant 0 : i32
    %c0_i32_0 = arith.constant 0 : i32
    %c0_i32_1 = arith.constant 0 : i32
    return %c0_i32, %c0_i32_0 : i32, i32
  }
  func.func @transform_9(%arg0: i32) -> (i32, i32) {
    %c0_i32 = arith.constant 0 : i32
    %c0_i32_0 = arith.constant 0 : i32
    return %c0_i32, %arg0 : i32, i32
  }
}

</mosaic_0001>

<llo_original>
// kernel: tpu_custom_call.1
$region0: #{tpu_custom_call.1}
  #allocation0 [shape = 'u32[]', space=smem, size = 0x4, offset = 0x4, fixed_abs, tag = 'smem constant byte address 0x4 - core index']
  #allocation1 [shape = 'u32[144,128]{1,0:T(1,128)}', space=vmem, size = 0x12000, scoped, tag = 'internal scratch']
  #allocation2 [shape = 'f32[1,1]{1,0:T(1,128)S(1)}', space=vmem, size = 0x200, scoped, tag = 'scoped memory for tpu_custom_call.1']
  %s0 = inlined_call_operand.vmem [shape: f32[8,24], index: 0, kind: input, shape index: {}]
  %s1 = inlined_call_operand.vmem [shape: f32[8,8], index: 1, kind: input, shape index: {}]
  %s2 = inlined_call_operand.vmem [shape: f32[32,24], index: 2, kind: input, shape index: {}]
  %s3 = inlined_call_operand.vmem [shape: f32[32,8], index: 3, kind: input, shape index: {}]
  %s4 = inlined_call_operand.vmem [shape: f32[32,1], index: 4, kind: input, shape index: {}]
  %s5 = inlined_call_operand.vmem [shape: f32[32,32], index: 5, kind: input, shape index: {}]
  %s6 = inlined_call_operand.vmem [shape: f32[32,1], index: 6, kind: input, shape index: {}]
  %s7 = inlined_call_operand.vmem [shape: f32[1,32], index: 7, kind: input, shape index: {}]
  %s8 = inlined_call_operand.<no memory space> [shape: f32[1,1], index: 8, kind: input, shape index: {}]
  %s9 = inlined_call_operand.hbm [shape: f32[1,8], index: 9, kind: output, shape index: {}]
  %s10 = sld [smem:[#allocation0]]
  $region46: #{tpu_custom_call.1} parent=0
    _
  %s12 = ssub.s32 1, %s10
  %s13 = scalar_select 0, %s12, %s10
  %v14 = vstv %s8
  %15 = vst [vmem:[#allocation2] sm:$0x1] %v14
  $region1: #{tpu_custom_call.1} parent=0
    #allocation3 [shape = 'u8[512]{0}', space=vmem, size = 0x400, scoped, tag = 'output window, operand 0, single buffered']
    #allocation4 [shape = 's32[1]{0}', space=sflag, size = 0x4, scoped, tag = 'scoped memory for tpu_custom_call.1']
    %16 = vsyncpa [#allocation4], 0
    // Predicated region
    $region2: #{tpu_custom_call.1} parent=1 // pred_check
      _
    $region3: #{tpu_custom_call.1} parent=1 // pred_check_branch
      %18 = sbr.rel (0) target = $region5
    $region4: #{tpu_custom_call.1} parent=1 // pred_region
      _
    $region5: #{tpu_custom_call.1} parent=1 // pred_fallthru
      _
    // Predicated region
    $region6: #{tpu_custom_call.1} parent=1 // pred_check
      _
    $region7: #{tpu_custom_call.1} parent=1 // pred_check_branch
      %20 = sbr.rel (0) target = $region9
    $region8: #{tpu_custom_call.1} parent=1 // pred_region
      _
    $region9: #{tpu_custom_call.1} parent=1 // pred_fallthru
      _
    // Predicated region
    $region10: #{tpu_custom_call.1} parent=1 // pred_check
      _
    $region11: #{tpu_custom_call.1} parent=1 // pred_check_branch
      %22 = sbr.rel (0) target = $region13
    $region12: #{tpu_custom_call.1} parent=1 // pred_region
      _
    $region13: #{tpu_custom_call.1} parent=1 // pred_fallthru
      _
    // Predicated region
    $region14: #{tpu_custom_call.1} parent=1 // pred_check
      _
    $region15: #{tpu_custom_call.1} parent=1 // pred_check_branch
      %24 = sbr.rel (0) target = $region17
    $region16: #{tpu_custom_call.1} parent=1 // pred_region
      _
    $region17: #{tpu_custom_call.1} parent=1 // pred_fallthru
      _
    // Predicated region
    $region18: #{tpu_custom_call.1} parent=1 // pred_check
      _
    $region19: #{tpu_custom_call.1} parent=1 // pred_check_branch
      %26 = sbr.rel (0) target = $region21
    $region20: #{tpu_custom_call.1} parent=1 // pred_region
      _
    $region21: #{tpu_custom_call.1} parent=1 // pred_fallthru
      _
    // Predicated region
    $region22: #{tpu_custom_call.1} parent=1 // pred_check
      _
    $region23: #{tpu_custom_call.1} parent=1 // pred_check_branch
      %28 = sbr.rel (0) target = $region25
    $region24: #{tpu_custom_call.1} parent=1 // pred_region
      _
    $region25: #{tpu_custom_call.1} parent=1 // pred_fallthru
      _
    // Predicated region
    $region26: #{tpu_custom_call.1} parent=1 // pred_check
      _
    $region27: #{tpu_custom_call.1} parent=1 // pred_check_branch
      %30 = sbr.rel (0) target = $region29
    $region28: #{tpu_custom_call.1} parent=1 // pred_region
      _
    $region29: #{tpu_custom_call.1} parent=1 // pred_fallthru
      _
    // Predicated region
    $region30: #{tpu_custom_call.1} parent=1 // pred_check
      _
    $region31: #{tpu_custom_call.1} parent=1 // pred_check_branch
      %32 = sbr.rel (0) target = $region33
    $region32: #{tpu_custom_call.1} parent=1 // pred_region
      _
    $region33: #{tpu_custom_call.1} parent=1 // pred_fallthru
      _
    // Predicated region
    $region34: #{tpu_custom_call.1} parent=1 // pred_check
      _
    $region35: #{tpu_custom_call.1} parent=1 // pred_check_branch
      %34 = sbr.rel (0) target = $region37
    $region36: #{tpu_custom_call.1} parent=1 // pred_region
      _
    $region37: #{tpu_custom_call.1} parent=1 // pred_fallthru
      _
    %v35 = vld [vmem:[%s2] sm:$0xff]
    %v36 = vld [vmem:[%s2 + $0x8] sm:$0xff]
    %v37 = vld [vmem:[%s2 + $0x10] sm:$0xff]
    %v38 = vld [vmem:[%s2 + $0x18] sm:$0xff]
    %v39 = vld [vmem:[%s0] sm:$0xff]
    %v40 = vld [vmem:[%s3] sm:$0xff]
    %v41 = vld [vmem:[%s3 + $0x8] sm:$0xff]
    %v42 = vld [vmem:[%s3 + $0x10] sm:$0xff]
    %v43 = vld [vmem:[%s3 + $0x18] sm:$0xff]
    %v44 = vld [vmem:[%s1] sm:$0xff]
    %vm45 = vcmask 64512
    %v47 = vsel %vm45, %v40, 0
    %v50 = vsel %vm45, %v41, 0
    %v53 = vsel %vm45, %v42, 0
    %v56 = vsel %vm45, %v43, 0
    %v59 = vsel %vm45, %v44, 0
    %61 = vmatprep.subr.mxu0 0.0
    %62 = vmatpush1.xpose.msra.mxu0 %v59
    %63 = vmatprep.subr.mxu0 0.0
    %64 = vmatpush1.xpose.msra.mxu0 0.0
    %65 = vmatprep.subr.mxu0 0.0
    %66 = vmatpush1.xpose.msra.mxu0 0.0
    %67 = vmatprep.subr.mxu0 0.0
    %68 = vmatpush1.xpose.msra.mxu0 0.0
    %69 = vmatprep.subr.mxu0 0.0
    %70 = vmatpush1.xpose.msra.mxu0 0.0
    %71 = vmatprep.subr.mxu0 0.0
    %72 = vmatpush1.xpose.msra.mxu0 0.0
    %73 = vmatprep.subr.mxu0 0.0
    %74 = vmatpush1.xpose.msra.mxu0 0.0
    %75 = vmatprep.subr.mxu0 0.0
    %76 = vmatpush1.xpose.msra.mxu0 0.0
    %77 = vmatprep.subr.mxu0 0.0
    %78 = vmatpush1.xpose.msra.mxu0 0.0
    %79 = vmatprep.subr.mxu0 0.0
    %80 = vmatpush1.xpose.msra.mxu0 0.0
    %81 = vmatprep.subr.mxu0 0.0
    %82 = vmatpush1.xpose.msra.mxu0 0.0
    %83 = vmatprep.subr.mxu0 0.0
    %84 = vmatpush1.xpose.msra.mxu0 0.0
    %85 = vmatprep.subr.mxu0 0.0
    %86 = vmatpush1.xpose.msra.mxu0 0.0
    %87 = vmatprep.subr.mxu0 0.0
    %88 = vmatpush1.xpose.msra.mxu0 0.0
    %89 = vmatprep.subr.mxu0 0.0
    %90 = vmatpush1.xpose.msra.mxu0 0.0
    %91 = vmatprep.subr.mxu0 0.0
    %92 = vmatpush1.xpose.msra.mxu0 0.0
    %93 = vmatprep.subr.mxu0 0.0
    %94 = vmatpush1.xpose.msra.mxu0 0.0
    %95 = vmatprep.subr.mxu0 0.0
    %96 = vmatpush1.xpose.msra.mxu0 0.0
    %97 = vmatprep.subr.mxu0 0.0
    %98 = vmatpush1.xpose.msra.mxu0 0.0
    %99 = vmatprep.subr.mxu0 0.0
    %100 = vmatpush1.xpose.msra.mxu0 0.0
    %101 = vmatprep.subr.mxu0 0.0
    %102 = vmatpush1.xpose.msra.mxu0 0.0
    %103 = vmatprep.subr.mxu0 0.0
    %104 = vmatpush1.xpose.msra.mxu0 0.0
    %105 = vmatprep.subr.mxu0 0.0
    %106 = vmatpush1.xpose.msra.mxu0 0.0
    %107 = vmatprep.subr.mxu0 0.0
    %108 = vmatpush1.xpose.msra.mxu0 0.0
    %109 = vmatprep.subr.mxu0 0.0
    %110 = vmatpush1.xpose.msra.mxu0 0.0
    %111 = vmatprep.subr.mxu0 0.0
    %112 = vmatpush1.xpose.msra.mxu0 0.0
    %113 = vmatprep.subr.mxu0 0.0
    %114 = vmatpush1.xpose.msra.mxu0 0.0
    %115 = vmatprep.subr.mxu0 0.0
    %116 = vmatpush1.xpose.msra.mxu0 0.0
    %117 = vmatprep.subr.mxu0 0.0
    %118 = vmatpush1.xpose.msra.mxu0 0.0
    %119 = vmatprep.subr.mxu0 0.0
    %120 = vmatpush1.xpose.msra.mxu0 0.0
    %121 = vmatprep.subr.mxu0 0.0
    %122 = vmatpush1.xpose.msra.mxu0 0.0
    %123 = vmatprep.subr.mxu0 0.0
    %124 = vmatpush1.xpose.msra.mxu0 0.0
    %125 = vmatprep.mubr.f32.mxu0 0.0
    %126 = vmatmul.mubr.f32.gmra.mrb[0].mxu0 %v47
    %v127 = vpop.f32.mrb[0].mxu0
    %v128 = vadd.f32 0.0, %v127
    %v129 = vpop.f32.mrb[0].mxu0
    %130 = vmatprep.mubr.f32.mxu0 0.0
    %131 = vmatmul.mubr.f32.gmra.mrb[0].mxu0 %v50
    %v132 = vpop.f32.mrb[0].mxu0
    %v133 = vadd.f32 0.0, %v132
    %v134 = vpop.f32.mrb[0].mxu0
    %135 = vmatprep.mubr.f32.mxu0 0.0
    %136 = vmatmul.mubr.f32.gmra.mrb[0].mxu0 %v53
    %v137 = vpop.f32.mrb[0].mxu0
    %v138 = vadd.f32 0.0, %v137
    %v139 = vpop.f32.mrb[0].mxu0
    %140 = vmatprep.mubr.f32.mxu0 0.0
    %141 = vmatmul.mubr.f32.gmra.mrb[0].mxu0 %v56
    %v142 = vpop.f32.mrb[0].mxu0
    %v143 = vadd.f32 0.0, %v142
    %v144 = vpop.f32.mrb[0].mxu0
    %145 = vdwg.mxu0
    %vm146 = vcmask 195584
    %v148 = vsel %vm146, %v35, 0
    %v151 = vsel %vm146, %v36, 0
    %v154 = vsel %vm146, %v37, 0
    %v157 = vsel %vm146, %v38, 0
    %v160 = vsel %vm146, %v39, 0
    %162 = vmatprep.subr.mxu0 0.0
    %163 = vmatpush1.xpose.msra.mxu0 %v160
    %164 = vmatprep.subr.mxu0 0.0
    %165 = vmatpush1.xpose.msra.mxu0 0.0
    %166 = vmatprep.subr.mxu0 0.0
    %167 = vmatpush1.xpose.msra.mxu0 0.0
    %168 = vmatprep.subr.mxu0 0.0
    %169 = vmatpush1.xpose.msra.mxu0 0.0
    %170 = vmatprep.subr.mxu0 0.0
    %171 = vmatpush1.xpose.msra.mxu0 0.0
    %172 = vmatprep.subr.mxu0 0.0
    %173 = vmatpush1.xpose.msra.mxu0 0.0
    %174 = vmatprep.subr.mxu0 0.0
    %175 = vmatpush1.xpose.msra.mxu0 0.0
    %176 = vmatprep.subr.mxu0 0.0
    %177 = vmatpush1.xpose.msra.mxu0 0.0
    %178 = vmatprep.subr.mxu0 0.0
    %179 = vmatpush1.xpose.msra.mxu0 0.0
    %180 = vmatprep.subr.mxu0 0.0
    %181 = vmatpush1.xpose.msra.mxu0 0.0
    %182 = vmatprep.subr.mxu0 0.0
    %183 = vmatpush1.xpose.msra.mxu0 0.0
    %184 = vmatprep.subr.mxu0 0.0
    %185 = vmatpush1.xpose.msra.mxu0 0.0
    %186 = vmatprep.subr.mxu0 0.0
    %187 = vmatpush1.xpose.msra.mxu0 0.0
    %188 = vmatprep.subr.mxu0 0.0
    %189 = vmatpush1.xpose.msra.mxu0 0.0
    %190 = vmatprep.subr.mxu0 0.0
    %191 = vmatpush1.xpose.msra.mxu0 0.0
    %192 = vmatprep.subr.mxu0 0.0
    %193 = vmatpush1.xpose.msra.mxu0 0.0
    %194 = vmatprep.subr.mxu0 0.0
    %195 = vmatpush1.xpose.msra.mxu0 0.0
    %196 = vmatprep.subr.mxu0 0.0
    %197 = vmatpush1.xpose.msra.mxu0 0.0
    %198 = vmatprep.subr.mxu0 0.0
    %199 = vmatpush1.xpose.msra.mxu0 0.0
    %200 = vmatprep.subr.mxu0 0.0
    %201 = vmatpush1.xpose.msra.mxu0 0.0
    %202 = vmatprep.subr.mxu0 0.0
    %203 = vmatpush1.xpose.msra.mxu0 0.0
    %204 = vmatprep.subr.mxu0 0.0
    %205 = vmatpush1.xpose.msra.mxu0 0.0
    %206 = vmatprep.subr.mxu0 0.0
    %207 = vmatpush1.xpose.msra.mxu0 0.0
    %208 = vmatprep.subr.mxu0 0.0
    %209 = vmatpush1.xpose.msra.mxu0 0.0
    %210 = vmatprep.subr.mxu0 0.0
    %211 = vmatpush1.xpose.msra.mxu0 0.0
    %212 = vmatprep.subr.mxu0 0.0
    %213 = vmatpush1.xpose.msra.mxu0 0.0
    %214 = vmatprep.subr.mxu0 0.0
    %215 = vmatpush1.xpose.msra.mxu0 0.0
    %216 = vmatprep.subr.mxu0 0.0
    %217 = vmatpush1.xpose.msra.mxu0 0.0
    %218 = vmatprep.subr.mxu0 0.0
    %219 = vmatpush1.xpose.msra.mxu0 0.0
    %220 = vmatprep.subr.mxu0 0.0
    %221 = vmatpush1.xpose.msra.mxu0 0.0
    %222 = vmatprep.subr.mxu0 0.0
    %223 = vmatpush1.xpose.msra.mxu0 0.0
    %224 = vmatprep.subr.mxu0 0.0
    %225 = vmatpush1.xpose.msra.mxu0 0.0
    %226 = vmatprep.mubr.f32.mxu0 0.0
    %227 = vmatmul.mubr.f32.gmra.mrb[0].mxu0 %v148
    %v228 = vpop.f32.mrb[0].mxu0
    %v229 = vadd.f32 %v128, %v228
    %v230 = vpop.f32.mrb[0].mxu0
    %231 = vmatprep.mubr.f32.mxu0 0.0
    %232 = vmatmul.mubr.f32.gmra.mrb[0].mxu0 %v151
    %v233 = vpop.f32.mrb[0].mxu0
    %v234 = vadd.f32 %v133, %v233
    %v235 = vpop.f32.mrb[0].mxu0
    %236 = vmatprep.mubr.f32.mxu0 0.0
    %237 = vmatmul.mubr.f32.gmra.mrb[0].mxu0 %v154
    %v238 = vpop.f32.mrb[0].mxu0
    %v239 = vadd.f32 %v138, %v238
    %v240 = vpop.f32.mrb[0].mxu0
    %241 = vmatprep.mubr.f32.mxu0 0.0
    %242 = vmatmul.mubr.f32.gmra.mrb[0].mxu0 %v157
    %v243 = vpop.f32.mrb[0].mxu0
    %v244 = vadd.f32 %v143, %v243
    %v245 = vpop.f32.mrb[0].mxu0
    %246 = vdwg.mxu0
    %v247 = vld [vmem:[%s4] sm:$0xff]
    %v248 = vld [vmem:[%s4 + $0x8] sm:$0xff]
    %v249 = vld [vmem:[%s4 + $0x10] sm:$0xff]
    %v250 = vld [vmem:[%s4 + $0x18] sm:$0xff]
    %252 = vset.pattern.permute.xlu0 0
    %253 = vperm.xlu0 %252, %v247
    %v254 = vpop.permute.xlu0 %253
    %257 = vset.pattern.permute.xlu0 0
    %258 = vperm.xlu0 %257, %v248
    %v259 = vpop.permute.xlu0 %258
    %262 = vset.pattern.permute.xlu0 0
    %263 = vperm.xlu0 %262, %v249
    %v264 = vpop.permute.xlu0 %263
    %267 = vset.pattern.permute.xlu0 0
    %268 = vperm.xlu0 %267, %v250
    %v269 = vpop.permute.xlu0 %268
    %v271 = vadd.f32 %v229, %v254
    %v272 = vadd.f32 %v234, %v259
    %v273 = vadd.f32 %v239, %v264
    %v274 = vadd.f32 %v244, %v269
    %v275 = vmax.f32 %v271, 0.0
    %v276 = vmax.f32 %v272, 0.0
    %v277 = vmax.f32 %v273, 0.0
    %v278 = vmax.f32 %v274, 0.0
    %v279 = vld [vmem:[%s5] sm:$0xff]
    %v280 = vld [vmem:[%s5 + $0x8] sm:$0xff]
    %v281 = vld [vmem:[%s5 + $0x10] sm:$0xff]
    %v282 = vld [vmem:[%s5 + $0x18] sm:$0xff]
    %v283 = vld [vmem:[%s6] sm:$0xff]
    %v284 = vld [vmem:[%s6 + $0x8] sm:$0xff]
    %v285 = vld [vmem:[%s6 + $0x10] sm:$0xff]
    %v286 = vld [vmem:[%s6 + $0x18] sm:$0xff]
    %288 = vset.pattern.permute.xlu0 0
    %289 = vperm.xlu0 %288, %v283
    %v290 = vpop.permute.xlu0 %289
    %293 = vset.pattern.permute.xlu0 0
    %294 = vperm.xlu0 %293, %v284
    %v295 = vpop.permute.xlu0 %294
    %298 = vset.pattern.permute.xlu0 0
    %299 = vperm.xlu0 %298, %v285
    %v300 = vpop.permute.xlu0 %299
    %303 = vset.pattern.permute.xlu0 0
    %304 = vperm.xlu0 %303, %v286
    %v305 = vpop.permute.xlu0 %304
    %vm307 = vcmask 261120
    %v309 = vsel %vm307, %v279, 0
    %v312 = vsel %vm307, %v280, 0
    %v315 = vsel %vm307, %v281, 0
    %v318 = vsel %vm307, %v282, 0
    %320 = vmatprep.subr.mxu0 0.0
    %321 = vmatpush1.msra.mxu0 %v275
    %322 = vmatprep.subr.mxu0 0.0
    %323 = vmatpush1.msra.mxu0 %v276
    %324 = vmatprep.subr.mxu0 0.0
    %325 = vmatpush1.msra.mxu0 %v277
    %326 = vmatprep.subr.mxu0 0.0
    %327 = vmatpush1.msra.mxu0 %v278
    %328 = vmatprep.subr.mxu0 0.0
    %329 = vmatpush1.msra.mxu0 0.0
    %330 = vmatprep.subr.mxu0 0.0
    %331 = vmatpush1.msra.mxu0 0.0
    %332 = vmatprep.subr.mxu0 0.0
    %333 = vmatpush1.msra.mxu0 0.0
    %334 = vmatprep.subr.mxu0 0.0
    %335 = vmatpush1.msra.mxu0 0.0
    %336 = vmatprep.subr.mxu0 0.0
    %337 = vmatpush1.msra.mxu0 0.0
    %338 = vmatprep.subr.mxu0 0.0
    %339 = vmatpush1.msra.mxu0 0.0
    %340 = vmatprep.subr.mxu0 0.0
    %341 = vmatpush1.msra.mxu0 0.0
    %342 = vmatprep.subr.mxu0 0.0
    %343 = vmatpush1.msra.mxu0 0.0
    %344 = vmatprep.subr.mxu0 0.0
    %345 = vmatpush1.msra.mxu0 0.0
    %346 = vmatprep.subr.mxu0 0.0
    %347 = vmatpush1.msra.mxu0 0.0
    %348 = vmatprep.subr.mxu0 0.0
    %349 = vmatpush1.msra.mxu0 0.0
    %350 = vmatprep.subr.mxu0 0.0
    %351 = vmatpush1.msra.mxu0 0.0
    %352 = vmatprep.subr.mxu0 0.0
    %353 = vmatpush1.msra.mxu0 0.0
    %354 = vmatprep.subr.mxu0 0.0
    %355 = vmatpush1.msra.mxu0 0.0
    %356 = vmatprep.subr.mxu0 0.0
    %357 = vmatpush1.msra.mxu0 0.0
    %358 = vmatprep.subr.mxu0 0.0
    %359 = vmatpush1.msra.mxu0 0.0
    %360 = vmatprep.subr.mxu0 0.0
    %361 = vmatpush1.msra.mxu0 0.0
    %362 = vmatprep.subr.mxu0 0.0
    %363 = vmatpush1.msra.mxu0 0.0
    %364 = vmatprep.subr.mxu0 0.0
    %365 = vmatpush1.msra.mxu0 0.0
    %366 = vmatprep.subr.mxu0 0.0
    %367 = vmatpush1.msra.mxu0 0.0
    %368 = vmatprep.subr.mxu0 0.0
    %369 = vmatpush1.msra.mxu0 0.0
    %370 = vmatprep.subr.mxu0 0.0
    %371 = vmatpush1.msra.mxu0 0.0
    %372 = vmatprep.subr.mxu0 0.0
    %373 = vmatpush1.msra.mxu0 0.0
    %374 = vmatprep.subr.mxu0 0.0
    %375 = vmatpush1.msra.mxu0 0.0
    %376 = vmatprep.subr.mxu0 0.0
    %377 = vmatpush1.msra.mxu0 0.0
    %378 = vmatprep.subr.mxu0 0.0
    %379 = vmatpush1.msra.mxu0 0.0
    %380 = vmatprep.subr.mxu0 0.0
    %381 = vmatpush1.msra.mxu0 0.0
    %382 = vmatprep.subr.mxu0 0.0
    %383 = vmatpush1.msra.mxu0 0.0
    %384 = vmatprep.mubr.f32.mxu0 0.0
    %385 = vmatmul.mubr.f32.gmra.mrb[0].mxu0 %v309
    %v386 = vpop.f32.mrb[0].mxu0
    %v387 = vadd.f32 %v290, %v386
    %v388 = vpop.f32.mrb[0].mxu0
    %389 = vmatprep.mubr.f32.mxu0 0.0
    %390 = vmatmul.mubr.f32.gmra.mrb[0].mxu0 %v312
    %v391 = vpop.f32.mrb[0].mxu0
    %v392 = vadd.f32 %v295, %v391
    %v393 = vpop.f32.mrb[0].mxu0
    %394 = vmatprep.mubr.f32.mxu0 0.0
    %395 = vmatmul.mubr.f32.gmra.mrb[0].mxu0 %v315
    %v396 = vpop.f32.mrb[0].mxu0
    %v397 = vadd.f32 %v300, %v396
    %v398 = vpop.f32.mrb[0].mxu0
    %399 = vmatprep.mubr.f32.mxu0 0.0
    %400 = vmatmul.mubr.f32.gmra.mrb[0].mxu0 %v318
    %v401 = vpop.f32.mrb[0].mxu0
    %v402 = vadd.f32 %v305, %v401
    %v403 = vpop.f32.mrb[0].mxu0
    %404 = vdwg.mxu0
    %v405 = vmax.f32 %v387, 0.0
    %v406 = vmax.f32 %v392, 0.0
    %v407 = vmax.f32 %v397, 0.0
    %v408 = vmax.f32 %v402, 0.0
    %v409 = vld [vmem:[%s7] sm:$0x1]
    %v410 = vld [vmem:[#allocation2] sm:$0x1]
    %412 = vset.pattern.permute.xlu0 0
    %413 = vperm.xlu0 %412, %v410
    %v414 = vpop.permute.xlu0 %413
    %v416 = vlaneseq
    %v417 = vshrl.u32 %v416, 7
    %v418 = vsub.s32 0, %v417
    %v419 = vrot.slane %v414, %v418
    %v421 = vsel %vm307, %v409, 0
    %423 = vmatprep.subr.mxu0 0.0
    %424 = vmatpush1.msra.mxu0 %v405
    %425 = vmatprep.subr.mxu0 0.0
    %426 = vmatpush1.msra.mxu0 %v406
    %427 = vmatprep.subr.mxu0 0.0
    %428 = vmatpush1.msra.mxu0 %v407
    %429 = vmatprep.subr.mxu0 0.0
    %430 = vmatpush1.msra.mxu0 %v408
    %431 = vmatprep.subr.mxu0 0.0
    %432 = vmatpush1.msra.mxu0 0.0
    %433 = vmatprep.subr.mxu0 0.0
    %434 = vmatpush1.msra.mxu0 0.0
    %435 = vmatprep.subr.mxu0 0.0
    %436 = vmatpush1.msra.mxu0 0.0
    %437 = vmatprep.subr.mxu0 0.0
    %438 = vmatpush1.msra.mxu0 0.0
    %439 = vmatprep.subr.mxu0 0.0
    %440 = vmatpush1.msra.mxu0 0.0
    %441 = vmatprep.subr.mxu0 0.0
    %442 = vmatpush1.msra.mxu0 0.0
    %443 = vmatprep.subr.mxu0 0.0
    %444 = vmatpush1.msra.mxu0 0.0
    %445 = vmatprep.subr.mxu0 0.0
    %446 = vmatpush1.msra.mxu0 0.0
    %447 = vmatprep.subr.mxu0 0.0
    %448 = vmatpush1.msra.mxu0 0.0
    %449 = vmatprep.subr.mxu0 0.0
    %450 = vmatpush1.msra.mxu0 0.0
    %451 = vmatprep.subr.mxu0 0.0
    %452 = vmatpush1.msra.mxu0 0.0
    %453 = vmatprep.subr.mxu0 0.0
    %454 = vmatpush1.msra.mxu0 0.0
    %455 = vmatprep.subr.mxu0 0.0
    %456 = vmatpush1.msra.mxu0 0.0
    %457 = vmatprep.subr.mxu0 0.0
    %458 = vmatpush1.msra.mxu0 0.0
    %459 = vmatprep.subr.mxu0 0.0
    %460 = vmatpush1.msra.mxu0 0.0
    %461 = vmatprep.subr.mxu0 0.0
    %462 = vmatpush1.msra.mxu0 0.0
    %463 = vmatprep.subr.mxu0 0.0
    %464 = vmatpush1.msra.mxu0 0.0
    %465 = vmatprep.subr.mxu0 0.0
    %466 = vmatpush1.msra.mxu0 0.0
    %467 = vmatprep.subr.mxu0 0.0
    %468 = vmatpush1.msra.mxu0 0.0
    %469 = vmatprep.subr.mxu0 0.0
    %470 = vmatpush1.msra.mxu0 0.0
    %471 = vmatprep.subr.mxu0 0.0
    %472 = vmatpush1.msra.mxu0 0.0
    %473 = vmatprep.subr.mxu0 0.0
    %474 = vmatpush1.msra.mxu0 0.0
    %475 = vmatprep.subr.mxu0 0.0
    %476 = vmatpush1.msra.mxu0 0.0
    %477 = vmatprep.subr.mxu0 0.0
    %478 = vmatpush1.msra.mxu0 0.0
    %479 = vmatprep.subr.mxu0 0.0
    %480 = vmatpush1.msra.mxu0 0.0
    %481 = vmatprep.subr.mxu0 0.0
    %482 = vmatpush1.msra.mxu0 0.0
    %483 = vmatprep.subr.mxu0 0.0
    %484 = vmatpush1.msra.mxu0 0.0
    %485 = vmatprep.subr.mxu0 0.0
    %486 = vmatpush1.msra.mxu0 0.0
    %487 = vmatprep.mubr.f32.mxu0 0.0
    %488 = vmatmul.mubr.f32.gmra.mrb[0].mxu0 %v421
    %v489 = vpop.f32.mrb[0].mxu0
    %v490 = vadd.f32 %v419, %v489
    %v491 = vpop.f32.mrb[0].mxu0
    %492 = vdwg.mxu0
    %vm493 = vcmask 57344
    %494 = vst.msk [vmem:[#allocation3] sm:$0x1] %vm493, %v490
    // Predicated region
    $region38: #{tpu_custom_call.1} parent=1 // pred_check
      _
    $region39: #{tpu_custom_call.1} parent=1 // pred_check_branch
      %496 = sbr.rel (0) target = $region41
    $region40: #{tpu_custom_call.1} parent=1 // pred_region
      %s498 = ssub.s32 16, 16
      %499 = vsyncadd [#allocation4], %s498
      %s501 = sshll.u32 [#allocation3], 4
      %s502 = int_to_ptr.vmem [resolvable:$true] %s501
      %504 = dma.vmem_to_hbm [thread:$0]  %s502, 16, %s9, [#allocation4]
    $region41: #{tpu_custom_call.1} parent=1 // pred_fallthru
      _
    // Predicated region
    $region42: #{tpu_custom_call.1} parent=1 // pred_check
      _
    $region43: #{tpu_custom_call.1} parent=1 // pred_check_branch
      %506 = sbr.rel (0) target = $region45
    $region44: #{tpu_custom_call.1} parent=1 // pred_region
      %507 = dma.done [#allocation4], 16
    $region45: #{tpu_custom_call.1} parent=1 // pred_fallthru
      _
    %508 = vsyncpa [#allocation4], 1

</llo_original>
